<compile_context>
chip_gen: v7x
topology: tpu7x:2x2x1
jax: 0.10.0
libtpu: 0.0.40
codegen_flags: <defaults>
</compile_context>

<pallas_src>
import jax
import jax.numpy as jnp
from jax import lax
from jax.experimental import pallas as pl
from jax.experimental.pallas import tpu as pltpu

LANES = 128


def _round_up(x, m):
    return ((x + m - 1) // m) * m


# ----------------------------------------------------------------------------
# Pallas kernel: one MXU dot (K = 9*C_in) + folded-BN shift + ReLU per row tile
# ----------------------------------------------------------------------------
def _fused_conv_dsbn_relu_kernel(x_ref, w_ref, sh_ref, o_ref):
    """x_ref : (TM, K)   bf16  im2col rows (K = 9*C_in)
       w_ref : (K, Cp)   bf16  conv taps with BN scale pre-folded
       sh_ref: (1, Cp)   f32   beta[dom] - mean[dom] * scale[dom]
       o_ref : (TM, Cp)  bf16  fused conv+BN+ReLU output rows
    """
    acc = jnp.dot(x_ref[...], w_ref[...], preferred_element_type=jnp.float32)
    y = acc + sh_ref[...]
    o_ref[...] = jnp.maximum(y, 0.0).astype(o_ref.dtype)


# ----------------------------------------------------------------------------
# Wrapper: the TwoInputSequential forward
# ----------------------------------------------------------------------------
def two_input_sequential_forward(x_nchw, conv_w, bn_gamma, bn_beta,
                                 bn_mean, bn_var, dom=0, eps=1e-5):
    """Forward of the representative TwoInputSequential instance.

    x_nchw : (N, C_in, H, W) float32
    conv_w : (C_out, C_in, 3, 3)
    bn_*   : (num_domains, C_out)
    dom    : static Python int (same role as `module(input, dom=self.dom)`)
    """
    N, C_in, H, W = x_nchw.shape
    C_out = conv_w.shape[0]
    D = bn_gamma.shape[0]
    if not (0 <= dom < D):
        raise ValueError(f"dom={dom} is out of range for {D} domains")

    K = 9 * C_in                       # folded contraction: 9 taps * C_in
    rows = N * H * W                   # all images' output rows, flattened

    # Output-channel padding: lane-dense 128 for real layers, but for tiny
    # C_out the 16x HBM write amplification dominates -> keep C_out (masked vst).
    Cp = _round_up(C_out, LANES) if C_out >= 64 else C_out

    # Row-tile size: small tiles keep per-buffer VMEM tiny and shard across
    # both v7x TensorCores; bigger tiles amortize per-step overhead for big
    # images.
    TM = 256 if rows <= 8 * 1024 else 1024
    rows_p = _round_up(max(rows, TM), TM)

    # --- wrapper im2col (cheap for small C_in): NCHW -> NHWC, pad, 9-tap K-fold
    x = jnp.transpose(x_nchw, (0, 2, 3, 1))                       # (N,H,W,C_in)
    xp = jnp.pad(x, ((0, 0), (1, 1), (1, 1), (0, 0)))
    patches = [xp[:, dy:dy + H, dx:dx + W, :]
               for dy in range(3) for dx in range(3)]
    x_col = jnp.concatenate(patches, axis=-1)                     # (N,H,W,K)
    x_col = x_col.reshape(rows, K).astype(jnp.bfloat16)
    x_col = jnp.pad(x_col, ((0, rows_p - rows), (0, 0)))          # junk rows

    # --- fold domain-selected eval-BN into the weights (f32, then bf16 cast) --
    # (dom is a static Python int, mirroring the container's dispatch)
    w_hwio = jnp.transpose(conv_w, (2, 3, 1, 0)).reshape(K, C_out)  # (dy,dx,cin)
    scale = bn_gamma[dom] / jnp.sqrt(bn_var[dom] + eps)             # (C_out,)
    shift = bn_beta[dom] - bn_mean[dom] * scale                     # (C_out,)
    w_fold = (w_hwio.astype(jnp.float32) * scale[None, :])
    if Cp != C_out:
        w_fold = jnp.pad(w_fold, ((0, 0), (0, Cp - C_out)))
        shift = jnp.pad(shift, (0, Cp - C_out))
    w_fold = w_fold.astype(jnp.bfloat16)                            # (K, Cp)
    shift = shift.reshape(1, Cp).astype(jnp.float32)

    flops = 2 * rows_p * K * Cp
    bytes_accessed = (rows_p * K * 2          # x_col (bf16)
                      + K * Cp * 2            # folded weights (bf16)
                      + Cp * 4                # shift
                      + rows_p * Cp * 2)      # output (bf16)

    out_flat = pl.pallas_call(
        _fused_conv_dsbn_relu_kernel,
        out_shape=jax.ShapeDtypeStruct((rows_p, Cp), jnp.bfloat16),
        grid=(rows_p // TM,),
        in_specs=[
            pl.BlockSpec((TM, K), lambda i: (i, 0)),     # im2col row tile
            pl.BlockSpec((K, Cp), lambda i: (0, 0)),     # folded conv taps
            pl.BlockSpec((1, Cp), lambda i: (0, 0)),     # bn shift
        ],
        out_specs=pl.BlockSpec((TM, Cp), lambda i: (i, 0)),
        compiler_params=pltpu.CompilerParams(
            dimension_semantics=("parallel",)),
        cost_estimate=pl.CostEstimate(flops=flops, transcendentals=0,
                                      bytes_accessed=bytes_accessed),
    )(x_col, w_fold, shift)

    # Drop row/channel padding; back to the caller's NCHW/f32 layout.
    out = out_flat[:rows, :C_out].reshape(N, H, W, C_out)
    return jnp.transpose(out, (0, 3, 1, 2)).astype(x_nchw.dtype)  # (N,C_out,H,W)


# ----------------------------------------------------------------------------
# Pure-JAX reference (f32) for correctness checking
# ----------------------------------------------------------------------------
def reference_forward(x_nchw, conv_w, bn_gamma, bn_beta, bn_mean, bn_var,
                      dom=0, eps=1e-5):
    x = jnp.transpose(x_nchw, (0, 2, 3, 1))                 # NHWC
    w = jnp.transpose(conv_w, (2, 3, 1, 0))                 # HWIO
    y = lax.conv_general_dilated(
        x, w, window_strides=(1, 1), padding="SAME",
        dimension_numbers=("NHWC", "HWIO", "NHWC"))
    scale = bn_gamma[dom] / jnp.sqrt(bn_var[dom] + eps)
    shift = bn_beta[dom] - bn_mean[dom] * scale
    y = jnp.maximum(y * scale + shift, 0.0)
    return jnp.transpose(y, (0, 3, 1, 2))                   # NCHW


if __name__ == "__main__":
    key = jax.random.PRNGKey(0)
    k_x, k_w, k_g, k_b, k_m, k_v = jax.random.split(key, 6)

    N, C_in, H, W = 2, 4, 16, 16
    C_out, num_domains = 8, 2

    x = jax.random.normal(k_x, (N, C_in, H, W), dtype=jnp.float32)
    conv_w = jax.random.normal(k_w, (C_out, C_in, 3, 3), dtype=jnp.float32) * 0.1
    bn_gamma = 1.0 + 0.1 * jax.random.normal(k_g, (num_domains, C_out), jnp.float32)
    bn_beta = 0.1 * jax.random.normal(k_b, (num_domains, C_out), jnp.float32)
    bn_mean = 0.1 * jax.random.normal(k_m, (num_domains, C_out), jnp.float32)
    bn_var = jax.random.uniform(k_v, (num_domains, C_out), jnp.float32,
                                minval=0.5, maxval=1.5)

    ok = True
    for dom in (0, 1):
        out = jax.block_until_ready(two_input_sequential_forward(
            x, conv_w, bn_gamma, bn_beta, bn_mean, bn_var, dom=dom))
        ref = reference_forward(
            x, conv_w, bn_gamma, bn_beta, bn_mean, bn_var, dom=dom)
        # bf16 MXU feed + bf16 output -> slightly looser tolerance than f32.
        ok = ok and bool(jnp.allclose(out, ref, atol=4e-2, rtol=4e-2))

    if ok:
        print("KERNEL_OK")
    else:
        print("MISMATCH")
</pallas_src>

<mosaic_0001>
module attributes {stable_mosaic.version = 11 : i64} {
  func.func @_fused_conv_dsbn_relu_kernel(%arg0: i32, %arg1: memref<256x36xbf16, #tpu.memory_space<vmem>>, %arg2: memref<36x8xbf16, #tpu.memory_space<vmem>>, %arg3: memref<1x8xf32, #tpu.memory_space<vmem>>, %arg4: memref<256x8xbf16, #tpu.memory_space<vmem>>) attributes {dimension_semantics = [#tpu.dimension_semantics<parallel>], iteration_bounds = array<i64: 2>, scalar_prefetch = 0 : i64, scratch_operands = 0 : i64, tpu.core_type = #tpu.core_type<tc>, window_params = [{transform_indices = @transform_0, window_bounds = array<i64: 256, 36>}, {pipeline_mode = #tpu.pipeline_mode<synchronous>, transform_indices = @transform_1, window_bounds = array<i64: 36, 8>}, {pipeline_mode = #tpu.pipeline_mode<synchronous>, transform_indices = @transform_2, window_bounds = array<i64: 1, 8>}, {transform_indices = @transform_3, window_bounds = array<i64: 256, 8>}]} {
    %c0 = arith.constant 0 : index
    %c0_0 = arith.constant 0 : index
    %0 = vector.load %arg1[%c0, %c0_0] : memref<256x36xbf16, #tpu.memory_space<vmem>>, vector<256x36xbf16>
    %c0_1 = arith.constant 0 : index
    %c0_2 = arith.constant 0 : index
    %1 = vector.load %arg2[%c0_1, %c0_2] : memref<36x8xbf16, #tpu.memory_space<vmem>>, vector<36x8xbf16>
    %cst = arith.constant dense<0.000000e+00> : vector<256x8xf32>
    %2 = tpu.matmul %0, %1, %cst {dimension_numbers = #tpu.dot_dimension_numbers<[1], [0], [0], [1], [0, 0, 1, 1], [], []>} : vector<256x36xbf16>, vector<36x8xbf16>, vector<256x8xf32> -> vector<256x8xf32>
    %c0_3 = arith.constant 0 : index
    %c0_4 = arith.constant 0 : index
    %3 = vector.load %arg3[%c0_3, %c0_4] : memref<1x8xf32, #tpu.memory_space<vmem>>, vector<1x8xf32>
    %4 = vector.broadcast %3 : vector<1x8xf32> to vector<256x8xf32>
    %5 = arith.addf %2, %4 : vector<256x8xf32>
    %cst_5 = arith.constant 0.000000e+00 : f32
    %6 = vector.broadcast %cst_5 : f32 to vector<256x8xf32>
    %7 = arith.maximumf %5, %6 : vector<256x8xf32>
    %8 = arith.truncf %7 : vector<256x8xf32> to vector<256x8xbf16>
    %c0_6 = arith.constant 0 : index
    %c0_7 = arith.constant 0 : index
    %9 = vector.load %arg4[%c0_6, %c0_7] : memref<256x8xbf16, #tpu.memory_space<vmem>>, vector<256x8xbf16>
    tpu.vector_store %arg4[%c0_6, %c0_7], %8 {strides = array<i32>} : memref<256x8xbf16, #tpu.memory_space<vmem>>, vector<256x8xbf16>,
    return
  }
  func.func @transform_0(%arg0: i32) -> (i32, i32) {
    %c0_i32 = arith.constant 0 : i32
    %c0_i32_0 = arith.constant 0 : i32
    return %arg0, %c0_i32 : i32, i32
  }
  func.func @transform_1(%arg0: i32) -> (i32, i32) {
    %c0_i32 = arith.constant 0 : i32
    %c0_i32_0 = arith.constant 0 : i32
    %c0_i32_1 = arith.constant 0 : i32
    return %c0_i32, %c0_i32_0 : i32, i32
  }
  func.func @transform_2(%arg0: i32) -> (i32, i32) {
    %c0_i32 = arith.constant 0 : i32
    %c0_i32_0 = arith.constant 0 : i32
    %c0_i32_1 = arith.constant 0 : i32
    return %c0_i32, %c0_i32_0 : i32, i32
  }
  func.func @transform_3(%arg0: i32) -> (i32, i32) {
    %c0_i32 = arith.constant 0 : i32
    %c0_i32_0 = arith.constant 0 : i32
    return %arg0, %c0_i32 : i32, i32
  }
}

</mosaic_0001>

<llo_original>
// kernel: tpu_custom_call.1
$region0: #{tpu_custom_call.1}
  #allocation0 [shape = 'u32[]', space=smem, size = 0x4, offset = 0x4, fixed_abs, tag = 'smem constant byte address 0x4 - core index']
  #allocation1 [shape = 'u32[144,128]{1,0:T(1,128)}', space=vmem, size = 0x12000, scoped, tag = 'internal scratch']
  %s0 = inlined_call_operand.vmem [shape: bf16[512,36], index: 0, kind: input, shape index: {}]
  %s1 = inlined_call_operand.vmem [shape: bf16[36,8], index: 1, kind: input, shape index: {}]
  %s2 = inlined_call_operand.vmem [shape: f32[1,8], index: 2, kind: input, shape index: {}]
  %s3 = inlined_call_operand.vmem [shape: bf16[512,8], index: 3, kind: output, shape index: {}]
  %s4 = sld [smem:[#allocation0]]
  $region45: #{tpu_custom_call.1} parent=0
    _
  %s6 = ssub.s32 1, %s4
  %s7 = scalar_select 0, %s6, %s4
  loop: start=0, step=1, limit=4
  $region2: #{tpu_custom_call.1} parent=0 // loop_pre_header
    _
  $region3: #{tpu_custom_call.1} parent=0 // loop_header
    %s9 = sphi 0, %s13
    %p10 = scmp.ge.s32.totalorder %s9, 4
    %s19 = sphi 0, %s21
    %s22 = sphi 0, %s19
    %s23 = sphi 0, %s22
    %s39 = sphi 0, %s23
    %s43 = sphi 0, %s43
    %s45 = sphi 0, %s43
    %s46 = sphi 0, %s45
    %s60 = sphi 0, %s46
    %s64 = sphi 0, %s64
    %s66 = sphi 0, %s64
    %s67 = sphi 0, %s66
    %s81 = sphi 0, %s67
    %s87 = sphi 0, %s89
    %s90 = sphi 0, %s87
    %s91 = sphi 0, %s90
    %s107 = sphi 0, %s91
  $region4: #{tpu_custom_call.1} parent=0 // loop_header_branch
    %12 = sbr.rel (%p10) target = $region8
  $region5: #{tpu_custom_call.1} parent=0 // loop_body
    %s14 = ssub.s32 %s9, 1
    %s15 = ssub.s32 %s9, 2
    %s16 = sadd.s32 %s9, 1
    %s17 = ssub.s32 %s9, %s16
    %p18 = scmp.eq.s32.totalorder %s17, 0
    %s20 = sadd.s32 %s19, 1
    %s21 = scalar_select %p18, %s19, %s20
    %p24 = pneg %p18
    %p25 = scmp.eq.s32.totalorder %s9, 1
    %p26 = por %p24, %p25
    %p27 = scmp.ne.s32.totalorder %s19, %s22
    %p28 = scmp.eq.s32.totalorder %s9, 0
    %p29 = por %p27, %p28
    %p30 = scmp.ne.s32.totalorder %s19, %s22
    %p31 = scmp.eq.s32.totalorder %s14, 1
    %p32 = por %p30, %p31
    %p33 = scmp.ne.s32.totalorder %s22, %s23
    %p34 = scmp.eq.s32.totalorder %s14, 0
    %p35 = por %p33, %p34
    %p36 = scmp.ne.s32.totalorder %s22, %s23
    %p37 = scmp.eq.s32.totalorder %s15, 1
    %p38 = por %p36, %p37
    %p40 = scmp.ne.s32.totalorder %s23, %s39
    %p41 = scmp.eq.s32.totalorder %s15, 0
    %p42 = por %p40, %p41
    %s44 = sadd.s32 %s43, 1
    %p47 = scmp.eq.s32.totalorder %s9, 1
    %p48 = scmp.ne.s32.totalorder %s43, %s45
    %p49 = scmp.eq.s32.totalorder %s9, 0
    %p50 = por %p48, %p49
    %p51 = scmp.ne.s32.totalorder %s43, %s45
    %p52 = scmp.eq.s32.totalorder %s14, 1
    %p53 = por %p51, %p52
    %p54 = scmp.ne.s32.totalorder %s45, %s46
    %p55 = scmp.eq.s32.totalorder %s14, 0
    %p56 = por %p54, %p55
    %p57 = scmp.ne.s32.totalorder %s45, %s46
    %p58 = scmp.eq.s32.totalorder %s15, 1
    %p59 = por %p57, %p58
    %p61 = scmp.ne.s32.totalorder %s46, %s60
    %p62 = scmp.eq.s32.totalorder %s15, 0
    %p63 = por %p61, %p62
    %s65 = sadd.s32 %s64, 1
    %p68 = scmp.eq.s32.totalorder %s9, 1
    %p69 = scmp.ne.s32.totalorder %s64, %s66
    %p70 = scmp.eq.s32.totalorder %s9, 0
    %p71 = por %p69, %p70
    %p72 = scmp.ne.s32.totalorder %s64, %s66
    %p73 = scmp.eq.s32.totalorder %s14, 1
    %p74 = por %p72, %p73
    %p75 = scmp.ne.s32.totalorder %s66, %s67
    %p76 = scmp.eq.s32.totalorder %s14, 0
    %p77 = por %p75, %p76
    %p78 = scmp.ne.s32.totalorder %s66, %s67
    %p79 = scmp.eq.s32.totalorder %s15, 1
    %p80 = por %p78, %p79
    %p82 = scmp.ne.s32.totalorder %s67, %s81
    %p83 = scmp.eq.s32.totalorder %s15, 0
    %p84 = por %p82, %p83
    %s85 = ssub.s32 %s9, %s16
    %p86 = scmp.eq.s32.totalorder %s85, 0
    %s88 = sadd.s32 %s87, 1
    %s89 = scalar_select %p86, %s87, %s88
    %p92 = pneg %p86
    %p93 = scmp.eq.s32.totalorder %s9, 1
    %p94 = por %p92, %p93
    %p95 = scmp.ne.s32.totalorder %s87, %s90
    %p96 = scmp.eq.s32.totalorder %s9, 0
    %p97 = por %p95, %p96
    %p98 = scmp.ne.s32.totalorder %s87, %s90
    %p99 = scmp.eq.s32.totalorder %s14, 1
    %p100 = por %p98, %p99
    %p101 = scmp.ne.s32.totalorder %s90, %s91
    %p102 = scmp.eq.s32.totalorder %s14, 0
    %p103 = por %p101, %p102
    %p104 = scmp.ne.s32.totalorder %s90, %s91
    %p105 = scmp.eq.s32.totalorder %s15, 1
    %p106 = por %p104, %p105
    %p108 = scmp.ne.s32.totalorder %s91, %s107
    %p109 = scmp.eq.s32.totalorder %s15, 0
    %p110 = por %p108, %p109
    %p111 = scmp.le.s32.totalorder 1, %s9
    %p112 = scmp.lt.s32.totalorder %s9, 3
    %p113 = pnand %p111, %p112
    %p114 = pneg %p113
    // Predicated region
    $region9: #{tpu_custom_call.1} parent=5 // pred_check
      _
    $region10: #{tpu_custom_call.1} parent=5 // pred_check_branch
      %116 = sbr.rel (%p113) target = $region12
    $region11: #{tpu_custom_call.1} parent=5 // pred_region
      %s117 = ssub.s32 %s9, 1
      // Predicated region
      $region13: #{tpu_custom_call.1} parent=11 // pred_check
        %p118 = pneg %p56
      $region14: #{tpu_custom_call.1} parent=11 // pred_check_branch
        %120 = sbr.rel (%p118) target = $region16
      $region15: #{tpu_custom_call.1} parent=11 // pred_region
        _
      $region16: #{tpu_custom_call.1} parent=11 // pred_fallthru
        _
      // Predicated region
      $region17: #{tpu_custom_call.1} parent=11 // pred_check
        %p121 = pneg %p77
      $region18: #{tpu_custom_call.1} parent=11 // pred_check_branch
        %123 = sbr.rel (%p121) target = $region20
      $region19: #{tpu_custom_call.1} parent=11 // pred_region
        _
      $region20: #{tpu_custom_call.1} parent=11 // pred_fallthru
        _
    $region12: #{tpu_custom_call.1} parent=5 // pred_fallthru
      _
    %p124 = scmp.lt.s32.totalorder %s9, 2
    // Predicated region
    $region21: #{tpu_custom_call.1} parent=5 // pred_check
      %p125 = pneg %p124
    $region22: #{tpu_custom_call.1} parent=5 // pred_check_branch
      %127 = sbr.rel (%p125) target = $region24
    $region23: #{tpu_custom_call.1} parent=5 // pred_region
      // Predicated region
      $region25: #{tpu_custom_call.1} parent=23 // pred_check
        %p128 = pneg %p29
      $region26: #{tpu_custom_call.1} parent=23 // pred_check_branch
        %130 = sbr.rel (%p128) target = $region28
      $region27: #{tpu_custom_call.1} parent=23 // pred_region
        %s131 = smul.u32 32, %s9
        %p132 = scmp.lt.s32.totalorder %s131, 63
        %s133 = scalar_select %p132, %s131, 63
        %s134 = smul.addr %s133, 4
        %s135 = scalar_lea.vmem %s0, %s134
        %s136 = smul.u32 32, %s9
      $region28: #{tpu_custom_call.1} parent=23 // pred_fallthru
        _
    $region24: #{tpu_custom_call.1} parent=5 // pred_fallthru
      _
    %p137 = scmp.le.s32.totalorder 1, %s9
    %p138 = scmp.lt.s32.totalorder %s9, 3
    %p139 = pnand %p137, %p138
    %p140 = pneg %p139
    // Predicated region
    $region29: #{tpu_custom_call.1} parent=5 // pred_check
      _
    $region30: #{tpu_custom_call.1} parent=5 // pred_check_branch
      %142 = sbr.rel (%p139) target = $region32
    $region31: #{tpu_custom_call.1} parent=5 // pred_region
      %s143 = ssub.s32 %s9, 1
      %s144 = smul.u32 32, %s14
      %p145 = scmp.lt.s32.totalorder %s144, 63
      %s146 = scalar_select %p145, %s144, 63
      %s147 = smul.addr %s146, 4
      %s148 = scalar_lea.vmem %s0, %s147
      %p149 = pneg %p35
      %p150 = pneg %p32
      %p151 = pneg %p56
      %p152 = pneg %p53
      %p153 = pneg %p77
      %p154 = pneg %p74
      %p155 = pneg %p103
      %p156 = pneg %p100
      %s157 = smul.u32 32, %s14
      %p158 = scmp.lt.s32.totalorder %s157, 63
      %s159 = scalar_select %p158, %s157, 63
      %s160 = smul.addr %s159, 4
      %s161 = scalar_lea.vmem %s3, %s160
      %s162 = smul.u32 32, %s14
      %p163 = scmp.lt.s32.totalorder %s162, 63
      %s164 = scalar_select %p163, %s162, 63
      %s165 = smul.addr %s164, 4
      %s166 = scalar_lea.vmem %s0, %s165
      %s167 = smul.u32 32, %s14
      %s168 = smul.u32 32, %s14
      %p169 = scmp.lt.s32.totalorder %s168, 63
      %s170 = scalar_select %p169, %s168, 63
      %s171 = smul.addr %s170, 4
      %s172 = scalar_lea.vmem %s3, %s171
      %s173 = smul.u32 32, %s14
      %v175 = vld [vmem:[%s166] sm:$0xf]
      %v176 = vld [vmem:[%s166 + $0x4] sm:$0xf]
      %v177 = vld [vmem:[%s166 + $0x8] sm:$0xf]
      %v178 = vld [vmem:[%s166 + $0xc] sm:$0xf]
      %v179 = vld [vmem:[%s166 + $0x10] sm:$0xf]
      %v180 = vld [vmem:[%s166 + $0x14] sm:$0xf]
      %v181 = vld [vmem:[%s166 + $0x18] sm:$0xf]
      %v182 = vld [vmem:[%s166 + $0x1c] sm:$0xf]
      %v183 = vld [vmem:[%s166 + $0x20] sm:$0xf]
      %v184 = vld [vmem:[%s166 + $0x24] sm:$0xf]
      %v185 = vld [vmem:[%s166 + $0x28] sm:$0xf]
      %v186 = vld [vmem:[%s166 + $0x2c] sm:$0xf]
      %v187 = vld [vmem:[%s166 + $0x30] sm:$0xf]
      %v188 = vld [vmem:[%s166 + $0x34] sm:$0xf]
      %v189 = vld [vmem:[%s166 + $0x38] sm:$0xf]
      %v190 = vld [vmem:[%s166 + $0x3c] sm:$0xf]
      %v191 = vld [vmem:[%s166 + $0x40] sm:$0xf]
      %v192 = vld [vmem:[%s166 + $0x44] sm:$0xf]
      %v193 = vld [vmem:[%s166 + $0x48] sm:$0xf]
      %v194 = vld [vmem:[%s166 + $0x4c] sm:$0xf]
      %v195 = vld [vmem:[%s166 + $0x50] sm:$0xf]
      %v196 = vld [vmem:[%s166 + $0x54] sm:$0xf]
      %v197 = vld [vmem:[%s166 + $0x58] sm:$0xf]
      %v198 = vld [vmem:[%s166 + $0x5c] sm:$0xf]
      %v199 = vld [vmem:[%s166 + $0x60] sm:$0xf]
      %v200 = vld [vmem:[%s166 + $0x64] sm:$0xf]
      %v201 = vld [vmem:[%s166 + $0x68] sm:$0xf]
      %v202 = vld [vmem:[%s166 + $0x6c] sm:$0xf]
      %v203 = vld [vmem:[%s166 + $0x70] sm:$0xf]
      %v204 = vld [vmem:[%s166 + $0x74] sm:$0xf]
      %v205 = vld [vmem:[%s166 + $0x78] sm:$0xf]
      %v206 = vld [vmem:[%s166 + $0x7c] sm:$0xf]
      %v207 = vld [vmem:[%s1] sm:$0xf]
      %v208 = vld [vmem:[%s1 + $0x4] sm:$0xf]
      %v209 = vld [vmem:[%s1 + $0x8] sm:$0xf]
      %v210 = vld [vmem:[%s1 + $0xc] sm:$0xf]
      %v211 = vld [vmem:[%s1 + $0x10] sm:$0x3]
      %v212 = vld [vmem:[%s2] sm:$0x1]
      %v214 = vlaneseq
      %v215 = vshrl.u32 %v214, 7
      %v216 = vsub.s32 0, %v215
      %v217 = vrot.slane %v212, %v216
      %v251 = vunpack.c.l.b16 %v175
      %v252 = vunpack.c.l.b16 %v176
      %v253 = vunpack.c.l.b16 %v177
      %v254 = vunpack.c.l.b16 %v178
      %v255 = vunpack.c.l.b16 %v179
      %v256 = vunpack.c.l.b16 %v180
      %v257 = vunpack.c.l.b16 %v181
      %v258 = vunpack.c.l.b16 %v182
      %v259 = vunpack.c.l.b16 %v183
      %v260 = vunpack.c.l.b16 %v184
      %v261 = vunpack.c.l.b16 %v185
      %v262 = vunpack.c.l.b16 %v186
      %v263 = vunpack.c.l.b16 %v187
      %v264 = vunpack.c.l.b16 %v188
      %v265 = vunpack.c.l.b16 %v189
      %v266 = vunpack.c.l.b16 %v190
      %v267 = vunpack.c.l.b16 %v191
      %v268 = vunpack.c.l.b16 %v192
      %v269 = vunpack.c.l.b16 %v193
      %v270 = vunpack.c.l.b16 %v194
      %v271 = vunpack.c.l.b16 %v195
      %v272 = vunpack.c.l.b16 %v196
      %v273 = vunpack.c.l.b16 %v197
      %v274 = vunpack.c.l.b16 %v198
      %v275 = vunpack.c.l.b16 %v199
      %v276 = vunpack.c.l.b16 %v200
      %v277 = vunpack.c.l.b16 %v201
      %v278 = vunpack.c.l.b16 %v202
      %v279 = vunpack.c.l.b16 %v203
      %v280 = vunpack.c.l.b16 %v204
      %v281 = vunpack.c.l.b16 %v205
      %v282 = vunpack.c.l.b16 %v206
      %v283 = vpack.c.b16 %v252, %v251
      %v284 = vpack.c.b16 %v254, %v253
      %v285 = vpack.c.b16 %v256, %v255
      %v286 = vpack.c.b16 %v258, %v257
      %v287 = vpack.c.b16 %v260, %v259
      %v288 = vpack.c.b16 %v262, %v261
      %v289 = vpack.c.b16 %v264, %v263
      %v290 = vpack.c.b16 %v266, %v265
      %v291 = vpack.c.b16 %v268, %v267
      %v292 = vpack.c.b16 %v270, %v269
      %v293 = vpack.c.b16 %v272, %v271
      %v294 = vpack.c.b16 %v274, %v273
      %v295 = vpack.c.b16 %v276, %v275
      %v296 = vpack.c.b16 %v278, %v277
      %v297 = vpack.c.b16 %v280, %v279
      %v298 = vpack.c.b16 %v282, %v281
      %v304 = vunpack.c.l.b16 %v207
      %v305 = vunpack.c.l.b16 %v208
      %v306 = vunpack.c.l.b16 %v209
      %v307 = vunpack.c.l.b16 %v210
      %v308 = vunpack.c.l.b16 %v211
      %v309 = vpack.c.b16 %v305, %v304
      %v310 = vpack.c.b16 %v307, %v306
      %v311 = vpack.c.b16 %v308, %v308
      %vm314 = vcmask 293888
      %v316 = vsel %vm314, %v283, 0
      %v319 = vsel %vm314, %v284, 0
      %v322 = vsel %vm314, %v285, 0
      %v325 = vsel %vm314, %v286, 0
      %v328 = vsel %vm314, %v287, 0
      %v331 = vsel %vm314, %v288, 0
      %v334 = vsel %vm314, %v289, 0
      %v337 = vsel %vm314, %v290, 0
      %v340 = vsel %vm314, %v291, 0
      %v343 = vsel %vm314, %v292, 0
      %v346 = vsel %vm314, %v293, 0
      %v349 = vsel %vm314, %v294, 0
      %v352 = vsel %vm314, %v295, 0
      %v355 = vsel %vm314, %v296, 0
      %v358 = vsel %vm314, %v297, 0
      %v361 = vsel %vm314, %v298, 0
      %vm363 = vcmask 1041408
      %v365 = vsel %vm363, %v311, 0
      %367 = vmatprep.subr.bf16.mxu0 0
      %368 = vmatpush1.bf16.msra.mxu0 %v309
      %369 = vmatprep.subr.bf16.mxu0 0
      %370 = vmatpush1.bf16.msra.mxu0 %v310
      %371 = vmatprep.subr.bf16.mxu0 0
      %372 = vmatpush1.bf16.msra.mxu0 %v365
      %373 = vmatprep.subr.bf16.mxu0 0
      %374 = vmatpush1.bf16.msra.mxu0 0
      %375 = vmatprep.subr.bf16.mxu0 0
      %376 = vmatpush1.bf16.msra.mxu0 0
      %377 = vmatprep.subr.bf16.mxu0 0
      %378 = vmatpush1.bf16.msra.mxu0 0
      %379 = vmatprep.subr.bf16.mxu0 0
      %380 = vmatpush1.bf16.msra.mxu0 0
      %381 = vmatprep.subr.bf16.mxu0 0
      %382 = vmatpush1.bf16.msra.mxu0 0
      %383 = vmatprep.subr.bf16.mxu0 0
      %384 = vmatpush1.bf16.msra.mxu0 0
      %385 = vmatprep.subr.bf16.mxu0 0
      %386 = vmatpush1.bf16.msra.mxu0 0
      %387 = vmatprep.subr.bf16.mxu0 0
      %388 = vmatpush1.bf16.msra.mxu0 0
      %389 = vmatprep.subr.bf16.mxu0 0
      %390 = vmatpush1.bf16.msra.mxu0 0
      %391 = vmatprep.subr.bf16.mxu0 0
      %392 = vmatpush1.bf16.msra.mxu0 0
      %393 = vmatprep.subr.bf16.mxu0 0
      %394 = vmatpush1.bf16.msra.mxu0 0
      %395 = vmatprep.subr.bf16.mxu0 0
      %396 = vmatpush1.bf16.msra.mxu0 0
      %397 = vmatprep.subr.bf16.mxu0 0
      %398 = vmatpush1.bf16.msra.mxu0 0
      %399 = vmatprep.mubr.bf16.mxu0 0
      %400 = vmatmul.mubr.bf16.gmra.mrb[0].mxu0 %v316
      %v401 = vpop.f32.mrb[0].mxu0
      %v402 = vadd.f32 %v217, %v401
      %v403 = vpop.f32.mrb[0].mxu0
      %v404 = vpop.f32.mrb[0].mxu0
      %v405 = vadd.f32 %v217, %v404
      %v406 = vpop.f32.mrb[0].mxu0
      %407 = vmatprep.mubr.bf16.mxu0 0
      %408 = vmatmul.mubr.bf16.gmra.mrb[0].mxu0 %v319
      %v409 = vpop.f32.mrb[0].mxu0
      %v410 = vadd.f32 %v217, %v409
      %v411 = vpop.f32.mrb[0].mxu0
      %v412 = vpop.f32.mrb[0].mxu0
      %v413 = vadd.f32 %v217, %v412
      %v414 = vpop.f32.mrb[0].mxu0
      %415 = vmatprep.mubr.bf16.mxu0 0
      %416 = vmatmul.mubr.bf16.gmra.mrb[0].mxu0 %v322
      %v417 = vpop.f32.mrb[0].mxu0
      %v418 = vadd.f32 %v217, %v417
      %v419 = vpop.f32.mrb[0].mxu0
      %v420 = vpop.f32.mrb[0].mxu0
      %v421 = vadd.f32 %v217, %v420
      %v422 = vpop.f32.mrb[0].mxu0
      %423 = vmatprep.mubr.bf16.mxu0 0
      %424 = vmatmul.mubr.bf16.gmra.mrb[0].mxu0 %v325
      %v425 = vpop.f32.mrb[0].mxu0
      %v426 = vadd.f32 %v217, %v425
      %v427 = vpop.f32.mrb[0].mxu0
      %v428 = vpop.f32.mrb[0].mxu0
      %v429 = vadd.f32 %v217, %v428
      %v430 = vpop.f32.mrb[0].mxu0
      %431 = vmatprep.mubr.bf16.mxu0 0
      %432 = vmatmul.mubr.bf16.gmra.mrb[0].mxu0 %v328
      %v433 = vpop.f32.mrb[0].mxu0
      %v434 = vadd.f32 %v217, %v433
      %v435 = vpop.f32.mrb[0].mxu0
      %v436 = vpop.f32.mrb[0].mxu0
      %v437 = vadd.f32 %v217, %v436
      %v438 = vpop.f32.mrb[0].mxu0
      %439 = vmatprep.mubr.bf16.mxu0 0
      %440 = vmatmul.mubr.bf16.gmra.mrb[0].mxu0 %v331
      %v441 = vpop.f32.mrb[0].mxu0
      %v442 = vadd.f32 %v217, %v441
      %v443 = vpop.f32.mrb[0].mxu0
      %v444 = vpop.f32.mrb[0].mxu0
      %v445 = vadd.f32 %v217, %v444
      %v446 = vpop.f32.mrb[0].mxu0
      %447 = vmatprep.mubr.bf16.mxu0 0
      %448 = vmatmul.mubr.bf16.gmra.mrb[0].mxu0 %v334
      %v449 = vpop.f32.mrb[0].mxu0
      %v450 = vadd.f32 %v217, %v449
      %v451 = vpop.f32.mrb[0].mxu0
      %v452 = vpop.f32.mrb[0].mxu0
      %v453 = vadd.f32 %v217, %v452
      %v454 = vpop.f32.mrb[0].mxu0
      %455 = vmatprep.mubr.bf16.mxu0 0
      %456 = vmatmul.mubr.bf16.gmra.mrb[0].mxu0 %v337
      %v457 = vpop.f32.mrb[0].mxu0
      %v458 = vadd.f32 %v217, %v457
      %v459 = vpop.f32.mrb[0].mxu0
      %v460 = vpop.f32.mrb[0].mxu0
      %v461 = vadd.f32 %v217, %v460
      %v462 = vpop.f32.mrb[0].mxu0
      %463 = vmatprep.mubr.bf16.mxu0 0
      %464 = vmatmul.mubr.bf16.gmra.mrb[0].mxu0 %v340
      %v465 = vpop.f32.mrb[0].mxu0
      %v466 = vadd.f32 %v217, %v465
      %v467 = vpop.f32.mrb[0].mxu0
      %v468 = vpop.f32.mrb[0].mxu0
      %v469 = vadd.f32 %v217, %v468
      %v470 = vpop.f32.mrb[0].mxu0
      %471 = vmatprep.mubr.bf16.mxu0 0
      %472 = vmatmul.mubr.bf16.gmra.mrb[0].mxu0 %v343
      %v473 = vpop.f32.mrb[0].mxu0
      %v474 = vadd.f32 %v217, %v473
      %v475 = vpop.f32.mrb[0].mxu0
      %v476 = vpop.f32.mrb[0].mxu0
      %v477 = vadd.f32 %v217, %v476
      %v478 = vpop.f32.mrb[0].mxu0
      %479 = vmatprep.mubr.bf16.mxu0 0
      %480 = vmatmul.mubr.bf16.gmra.mrb[0].mxu0 %v346
      %v481 = vpop.f32.mrb[0].mxu0
      %v482 = vadd.f32 %v217, %v481
      %v483 = vpop.f32.mrb[0].mxu0
      %v484 = vpop.f32.mrb[0].mxu0
      %v485 = vadd.f32 %v217, %v484
      %v486 = vpop.f32.mrb[0].mxu0
      %487 = vmatprep.mubr.bf16.mxu0 0
      %488 = vmatmul.mubr.bf16.gmra.mrb[0].mxu0 %v349
      %v489 = vpop.f32.mrb[0].mxu0
      %v490 = vadd.f32 %v217, %v489
      %v491 = vpop.f32.mrb[0].mxu0
      %v492 = vpop.f32.mrb[0].mxu0
      %v493 = vadd.f32 %v217, %v492
      %v494 = vpop.f32.mrb[0].mxu0
      %495 = vmatprep.mubr.bf16.mxu0 0
      %496 = vmatmul.mubr.bf16.gmra.mrb[0].mxu0 %v352
      %v497 = vpop.f32.mrb[0].mxu0
      %v498 = vadd.f32 %v217, %v497
      %v499 = vpop.f32.mrb[0].mxu0
      %v500 = vpop.f32.mrb[0].mxu0
      %v501 = vadd.f32 %v217, %v500
      %v502 = vpop.f32.mrb[0].mxu0
      %503 = vmatprep.mubr.bf16.mxu0 0
      %504 = vmatmul.mubr.bf16.gmra.mrb[0].mxu0 %v355
      %v505 = vpop.f32.mrb[0].mxu0
      %v506 = vadd.f32 %v217, %v505
      %v507 = vpop.f32.mrb[0].mxu0
      %v508 = vpop.f32.mrb[0].mxu0
      %v509 = vadd.f32 %v217, %v508
      %v510 = vpop.f32.mrb[0].mxu0
      %511 = vmatprep.mubr.bf16.mxu0 0
      %512 = vmatmul.mubr.bf16.gmra.mrb[0].mxu0 %v358
      %v513 = vpop.f32.mrb[0].mxu0
      %v514 = vadd.f32 %v217, %v513
      %v515 = vpop.f32.mrb[0].mxu0
      %v516 = vpop.f32.mrb[0].mxu0
      %v517 = vadd.f32 %v217, %v516
      %v518 = vpop.f32.mrb[0].mxu0
      %519 = vmatprep.mubr.bf16.mxu0 0
      %520 = vmatmul.mubr.bf16.gmra.mrb[0].mxu0 %v361
      %v521 = vpop.f32.mrb[0].mxu0
      %v522 = vadd.f32 %v217, %v521
      %v523 = vpop.f32.mrb[0].mxu0
      %v524 = vpop.f32.mrb[0].mxu0
      %v525 = vadd.f32 %v217, %v524
      %v526 = vpop.f32.mrb[0].mxu0
      %527 = vdwg.mxu0
      %v528 = vmax.f32 %v402, 0.0
      %v529 = vmax.f32 %v405, 0.0
      %v530 = vmax.f32 %v410, 0.0
      %v531 = vmax.f32 %v413, 0.0
      %v532 = vmax.f32 %v418, 0.0
      %v533 = vmax.f32 %v421, 0.0
      %v534 = vmax.f32 %v426, 0.0
      %v535 = vmax.f32 %v429, 0.0
      %v536 = vmax.f32 %v434, 0.0
      %v537 = vmax.f32 %v437, 0.0
      %v538 = vmax.f32 %v442, 0.0
      %v539 = vmax.f32 %v445, 0.0
      %v540 = vmax.f32 %v450, 0.0
      %v541 = vmax.f32 %v453, 0.0
      %v542 = vmax.f32 %v458, 0.0
      %v543 = vmax.f32 %v461, 0.0
      %v544 = vmax.f32 %v466, 0.0
      %v545 = vmax.f32 %v469, 0.0
      %v546 = vmax.f32 %v474, 0.0
      %v547 = vmax.f32 %v477, 0.0
      %v548 = vmax.f32 %v482, 0.0
      %v549 = vmax.f32 %v485, 0.0
      %v550 = vmax.f32 %v490, 0.0
      %v551 = vmax.f32 %v493, 0.0
      %v552 = vmax.f32 %v498, 0.0
      %v553 = vmax.f32 %v501, 0.0
      %v554 = vmax.f32 %v506, 0.0
      %v555 = vmax.f32 %v509, 0.0
      %v556 = vmax.f32 %v514, 0.0
      %v557 = vmax.f32 %v517, 0.0
      %v558 = vmax.f32 %v522, 0.0
      %v559 = vmax.f32 %v525, 0.0
      %v560 = vpack.c.bf16 %v529, %v528
      %v561 = vpack.c.bf16 %v531, %v530
      %v562 = vpack.c.bf16 %v533, %v532
      %v563 = vpack.c.bf16 %v535, %v534
      %v564 = vpack.c.bf16 %v537, %v536
      %v565 = vpack.c.bf16 %v539, %v538
      %v566 = vpack.c.bf16 %v541, %v540
      %v567 = vpack.c.bf16 %v543, %v542
      %v568 = vpack.c.bf16 %v545, %v544
      %v569 = vpack.c.bf16 %v547, %v546
      %v570 = vpack.c.bf16 %v549, %v548
      %v571 = vpack.c.bf16 %v551, %v550
      %v572 = vpack.c.bf16 %v553, %v552
      %v573 = vpack.c.bf16 %v555, %v554
      %v574 = vpack.c.bf16 %v557, %v556
      %v575 = vpack.c.bf16 %v559, %v558
      %v592 = vunpack.c.l.b16 %v560
      %v593 = vunpack.c.h.b16 %v560
      %v594 = vunpack.c.l.b16 %v561
      %v595 = vunpack.c.h.b16 %v561
      %v596 = vunpack.c.l.b16 %v562
      %v597 = vunpack.c.h.b16 %v562
      %v598 = vunpack.c.l.b16 %v563
      %v599 = vunpack.c.h.b16 %v563
      %v600 = vunpack.c.l.b16 %v564
      %v601 = vunpack.c.h.b16 %v564
      %v602 = vunpack.c.l.b16 %v565
      %v603 = vunpack.c.h.b16 %v565
      %v604 = vunpack.c.l.b16 %v566
      %v605 = vunpack.c.h.b16 %v566
      %v606 = vunpack.c.l.b16 %v567
      %v607 = vunpack.c.h.b16 %v567
      %v608 = vunpack.c.l.b16 %v568
      %v609 = vunpack.c.h.b16 %v568
      %v610 = vunpack.c.l.b16 %v569
      %v611 = vunpack.c.h.b16 %v569
      %v612 = vunpack.c.l.b16 %v570
      %v613 = vunpack.c.h.b16 %v570
      %v614 = vunpack.c.l.b16 %v571
      %v615 = vunpack.c.h.b16 %v571
      %v616 = vunpack.c.l.b16 %v572
      %v617 = vunpack.c.h.b16 %v572
      %v618 = vunpack.c.l.b16 %v573
      %v619 = vunpack.c.h.b16 %v573
      %v620 = vunpack.c.l.b16 %v574
      %v621 = vunpack.c.h.b16 %v574
      %v622 = vunpack.c.l.b16 %v575
      %v623 = vunpack.c.h.b16 %v575
      %v624 = vpack.c.b16 %v592, %v592
      %v625 = vpack.c.b16 %v593, %v593
      %v626 = vpack.c.b16 %v594, %v594
      %v627 = vpack.c.b16 %v595, %v595
      %v628 = vpack.c.b16 %v596, %v596
      %v629 = vpack.c.b16 %v597, %v597
      %v630 = vpack.c.b16 %v598, %v598
      %v631 = vpack.c.b16 %v599, %v599
      %v632 = vpack.c.b16 %v600, %v600
      %v633 = vpack.c.b16 %v601, %v601
      %v634 = vpack.c.b16 %v602, %v602
      %v635 = vpack.c.b16 %v603, %v603
      %v636 = vpack.c.b16 %v604, %v604
      %v637 = vpack.c.b16 %v605, %v605
      %v638 = vpack.c.b16 %v606, %v606
      %v639 = vpack.c.b16 %v607, %v607
      %v640 = vpack.c.b16 %v608, %v608
      %v641 = vpack.c.b16 %v609, %v609
      %v642 = vpack.c.b16 %v610, %v610
      %v643 = vpack.c.b16 %v611, %v611
      %v644 = vpack.c.b16 %v612, %v612
      %v645 = vpack.c.b16 %v613, %v613
      %v646 = vpack.c.b16 %v614, %v614
      %v647 = vpack.c.b16 %v615, %v615
      %v648 = vpack.c.b16 %v616, %v616
      %v649 = vpack.c.b16 %v617, %v617
      %v650 = vpack.c.b16 %v618, %v618
      %v651 = vpack.c.b16 %v619, %v619
      %v652 = vpack.c.b16 %v620, %v620
      %v653 = vpack.c.b16 %v621, %v621
      %v654 = vpack.c.b16 %v622, %v622
      %v655 = vpack.c.b16 %v623, %v623
      %vm688 = vcmask 60416
      %689 = vst.msk [vmem:[%s172] sm:$0xf] %vm688, %v624
      %690 = vst.msk [vmem:[%s172 + $0x4] sm:$0xf] %vm688, %v625
      %691 = vst.msk [vmem:[%s172 + $0x8] sm:$0xf] %vm688, %v626
      %692 = vst.msk [vmem:[%s172 + $0xc] sm:$0xf] %vm688, %v627
      %693 = vst.msk [vmem:[%s172 + $0x10] sm:$0xf] %vm688, %v628
      %694 = vst.msk [vmem:[%s172 + $0x14] sm:$0xf] %vm688, %v629
      %695 = vst.msk [vmem:[%s172 + $0x18] sm:$0xf] %vm688, %v630
      %696 = vst.msk [vmem:[%s172 + $0x1c] sm:$0xf] %vm688, %v631
      %697 = vst.msk [vmem:[%s172 + $0x20] sm:$0xf] %vm688, %v632
      %698 = vst.msk [vmem:[%s172 + $0x24] sm:$0xf] %vm688, %v633
      %699 = vst.msk [vmem:[%s172 + $0x28] sm:$0xf] %vm688, %v634
      %700 = vst.msk [vmem:[%s172 + $0x2c] sm:$0xf] %vm688, %v635
      %701 = vst.msk [vmem:[%s172 + $0x30] sm:$0xf] %vm688, %v636
      %702 = vst.msk [vmem:[%s172 + $0x34] sm:$0xf] %vm688, %v637
      %703 = vst.msk [vmem:[%s172 + $0x38] sm:$0xf] %vm688, %v638
      %704 = vst.msk [vmem:[%s172 + $0x3c] sm:$0xf] %vm688, %v639
      %705 = vst.msk [vmem:[%s172 + $0x40] sm:$0xf] %vm688, %v640
      %706 = vst.msk [vmem:[%s172 + $0x44] sm:$0xf] %vm688, %v641
      %707 = vst.msk [vmem:[%s172 + $0x48] sm:$0xf] %vm688, %v642
      %708 = vst.msk [vmem:[%s172 + $0x4c] sm:$0xf] %vm688, %v643
      %709 = vst.msk [vmem:[%s172 + $0x50] sm:$0xf] %vm688, %v644
      %710 = vst.msk [vmem:[%s172 + $0x54] sm:$0xf] %vm688, %v645
      %711 = vst.msk [vmem:[%s172 + $0x58] sm:$0xf] %vm688, %v646
      %712 = vst.msk [vmem:[%s172 + $0x5c] sm:$0xf] %vm688, %v647
      %713 = vst.msk [vmem:[%s172 + $0x60] sm:$0xf] %vm688, %v648
      %714 = vst.msk [vmem:[%s172 + $0x64] sm:$0xf] %vm688, %v649
      %715 = vst.msk [vmem:[%s172 + $0x68] sm:$0xf] %vm688, %v650
      %716 = vst.msk [vmem:[%s172 + $0x6c] sm:$0xf] %vm688, %v651
      %717 = vst.msk [vmem:[%s172 + $0x70] sm:$0xf] %vm688, %v652
      %718 = vst.msk [vmem:[%s172 + $0x74] sm:$0xf] %vm688, %v653
      %719 = vst.msk [vmem:[%s172 + $0x78] sm:$0xf] %vm688, %v654
      %720 = vst.msk [vmem:[%s172 + $0x7c] sm:$0xf] %vm688, %v655
      %s721 = smul.u32 32, %s14
      %p722 = scmp.lt.s32.totalorder %s721, 63
      %s723 = scalar_select %p722, %s721, 63
      %s724 = smul.addr %s723, 4
      %s725 = scalar_lea.vmem %s3, %s724
      // Predicated region
      $region33: #{tpu_custom_call.1} parent=31 // pred_check
        %p726 = pneg %p100
      $region34: #{tpu_custom_call.1} parent=31 // pred_check_branch
        %728 = sbr.rel (%p726) target = $region36
      $region35: #{tpu_custom_call.1} parent=31 // pred_region
        %s729 = smul.u32 32, %s14
      $region36: #{tpu_custom_call.1} parent=31 // pred_fallthru
        _
    $region32: #{tpu_custom_call.1} parent=5 // pred_fallthru
      _
    %p730 = scmp.le.s32.totalorder 2, %s9
    // Predicated region
    $region37: #{tpu_custom_call.1} parent=5 // pred_check
      %p731 = pneg %p730
    $region38: #{tpu_custom_call.1} parent=5 // pred_check_branch
      %733 = sbr.rel (%p731) target = $region40
    $region39: #{tpu_custom_call.1} parent=5 // pred_region
      %s734 = ssub.s32 %s9, 2
      // Predicated region
      $region41: #{tpu_custom_call.1} parent=39 // pred_check
        %p735 = pneg %p106
      $region42: #{tpu_custom_call.1} parent=39 // pred_check_branch
        %737 = sbr.rel (%p735) target = $region44
      $region43: #{tpu_custom_call.1} parent=39 // pred_region
        %s738 = smul.u32 32, %s15
        %p739 = scmp.lt.s32.totalorder %s738, 63
        %s740 = scalar_select %p739, %s738, 63
        %s741 = smul.addr %s740, 4
        %s742 = scalar_lea.vmem %s3, %s741
      $region44: #{tpu_custom_call.1} parent=39 // pred_fallthru
        _
    $region40: #{tpu_custom_call.1} parent=5 // pred_fallthru
      _
  $region6: #{tpu_custom_call.1} parent=0 // loop_footer
    %s13 = sadd.s32 1, %s9
  $region7: #{tpu_custom_call.1} parent=0 // loop_footer_branch
    %8 = sbr.rel target = $region3
  $region8: #{tpu_custom_call.1} parent=0 // loop_exit
    _

</llo_original>
